<compile_context>
chip_gen: v6e
topology: v6e:2x2x1
jax: 0.10.0
libtpu: 0.0.40
codegen_flags: <defaults>
</compile_context>

<pallas_src>
import functools

import jax
import jax.numpy as jnp
from jax.experimental import pallas as pl
from jax.experimental.pallas import tpu as pltpu

NEG_SLOPE = 0.2


def _leaky(x):
    return jnp.where(x > 0, x, NEG_SLOPE * x)


# --------------------------------------------------------------------------
# Pallas kernel: the full residual stack (all depth layers, all batches).
# --------------------------------------------------------------------------
def _stack_kernel(x_ref, w1_ref, w2_ref, o_ref, xpad_ref, *,
                  B, L, C, K, depth, pad_left, Lp):
    # x_ref:    (C, B*L)              f32   lane-dense residual-stream input
    # w1_ref:   (depth, C*boom, K*C)  bf16  transposed im2col dilated-conv weights
    # w2_ref:   (depth, C, C*boom)    bf16  transposed 1x1 conv weights
    # o_ref:    (C, B*L)              f32   lane-dense output
    # xpad_ref: (B*C, Lp)             bf16  zero-padded activated signal scratch

    right = Lp - pad_left - L
    # Zero ONLY the halo columns, once.  The center is overwritten every layer,
    # and the zero border stays valid across layers because leaky(0) == 0 and
    # cc.Conv1d's zero padding is applied post-activation.
    if pad_left > 0:
        xpad_ref[:, :pad_left] = jnp.zeros((B * C, pad_left), jnp.bfloat16)
    if right > 0:
        xpad_ref[:, pad_left + L:] = jnp.zeros((B * C, right), jnp.bfloat16)

    cur = x_ref[...]                        # (C, B*L) f32 residual stream

    for i in range(depth):                  # static unroll over depth (=3)
        dil = 3 ** i
        pad = (K - 1) * dil // 2            # cc.get_padding(..., "centered"), odd K

        # LeakyReLU(0.2), cast once to bf16, stage into the padded scratch.
        h_bf = _leaky(cur).astype(jnp.bfloat16)          # (C, B*L)
        for b in range(B):
            xpad_ref[b * C:(b + 1) * C, pad_left:pad_left + L] = \
                h_bf[:, b * L:(b + 1) * L]

        # im2col^T: K shifted taps stacked along sublanes -> (K*C, B*L).
        # Lanes stay 128-dense; shifts are static lane slices of the padded
        # scratch (no (B,L,C) relayouts).  The center tap is the unshifted
        # activation itself.
        rows = []
        for k in range(K):
            start = pad_left - pad + k * dil
            if start == pad_left:
                rows.append(h_bf)
            else:
                rows.append(jnp.concatenate(
                    [xpad_ref[b * C:(b + 1) * C, start:start + L]
                     for b in range(B)], axis=-1))
        him_t = jnp.concatenate(rows, axis=0)            # (K*C, B*L) bf16

        # (C*boom, K*C) x (K*C, B*L) -> (C*boom, B*L): MXU output N = 128 lanes.
        y = jnp.dot(w1_ref[i], him_t, preferred_element_type=jnp.float32)
        h2 = _leaky(y).astype(jnp.bfloat16)
        # (C, C*boom) x (C*boom, B*L) -> (C, B*L)
        z = jnp.dot(w2_ref[i], h2, preferred_element_type=jnp.float32)

        cur = cur + z                                    # residual add, f32

    # Lane-dense unmasked stores, no final transpose needed.
    o_ref[...] = cur.astype(o_ref.dtype)


def residual_stack(x_ncl, w1_stack, w2_stack, *, kernel_size, depth):
    """Full ResidualStack forward.  x_ncl: (B, C, L) (PyTorch NCL layout)."""
    B, C, L = x_ncl.shape
    K = kernel_size
    depth_w, Cb, KC = w1_stack.shape
    assert depth_w == depth and KC == K * C

    pad_max = (K - 1) * (3 ** (depth - 1)) // 2
    Lp = ((L + 2 * pad_max + 127) // 128) * 128   # lane-dense padded length
    pad_left = (Lp - L) // 2                      # >= pad_max by construction

    M = B * L
    # The single layout change: NCL -> lane-dense (C, B*L), done once here.
    x_cm = jnp.transpose(x_ncl, (1, 0, 2)).reshape(C, M)

    kern = functools.partial(_stack_kernel, B=B, L=L, C=C, K=K,
                             depth=depth, pad_left=pad_left, Lp=Lp)

    flops = 2 * depth * (M * KC * Cb + M * Cb * C)
    bytes_accessed = (C * M * 4                       # input
                      + w1_stack.size * 2 + w2_stack.size * 2
                      + C * M * 4)                    # output

    out_cm = pl.pallas_call(
        kern,
        out_shape=jax.ShapeDtypeStruct((C, M), jnp.float32),
        grid_spec=pltpu.PrefetchScalarGridSpec(
            num_scalar_prefetch=0,
            grid=(1,),                 # single fused step: everything VMEM-resident
            in_specs=[
                pl.BlockSpec((C, M), lambda i: (0, 0)),
                pl.BlockSpec((depth, Cb, KC), lambda i: (0, 0, 0)),
                pl.BlockSpec((depth, C, Cb), lambda i: (0, 0, 0)),
            ],
            out_specs=pl.BlockSpec((C, M), lambda i: (0, 0)),
            scratch_shapes=[pltpu.VMEM((B * C, Lp), jnp.bfloat16)],
        ),
        compiler_params=pltpu.CompilerParams(
            dimension_semantics=("arbitrary",)),
        cost_estimate=pl.CostEstimate(
            flops=flops, transcendentals=0, bytes_accessed=bytes_accessed),
    )(x_cm, w1_stack, w2_stack)

    # (C, B*L) -> (C, B, L) -> (B, C, L)
    return jnp.transpose(out_cm.reshape(C, B, L), (1, 0, 2))


# --------------------------------------------------------------------------
# Parameter setup (plain-JAX glue): weight norm + grouped->dense + im2col^T.
# --------------------------------------------------------------------------
def weight_norm(v, g):
    # torch.nn.utils.weight_norm with dim=0: w = g * v / ||v|| per out-channel
    norm = jnp.sqrt(jnp.sum(v * v, axis=tuple(range(1, v.ndim)), keepdims=True))
    return g.reshape((-1,) + (1,) * (v.ndim - 1)) * v / norm


def grouped_conv_to_tap_matrices(w, groups):
    # w: (C_out, C_in//groups, K) (PyTorch OIH)  ->  (K, C_in, C_out) dense
    # block-diagonal per-tap matmul weights.
    C_out, Cin_g, K = w.shape
    C_in = Cin_g * groups
    out_g = C_out // groups
    dense = jnp.zeros((K, C_in, C_out), w.dtype)
    for g in range(groups):
        blk = jnp.transpose(w[g * out_g:(g + 1) * out_g], (2, 1, 0))  # (K,Cin_g,out_g)
        dense = dense.at[:, g * Cin_g:(g + 1) * Cin_g,
                         g * out_g:(g + 1) * out_g].set(blk)
    return dense


def make_params(key, dim, kernel_size, boom, depth, groups):
    torch_params, w1_list, w2_list = [], [], []
    for _ in range(depth):
        key, k1, k2, k3, k4 = jax.random.split(key, 5)
        v1 = 0.1 * jax.random.normal(k1, (dim * boom, dim // groups, kernel_size),
                                     jnp.float32)
        g1 = jnp.abs(jax.random.normal(k2, (dim * boom,), jnp.float32)) + 0.5
        v2 = 0.1 * jax.random.normal(k3, (dim, dim * boom, 1), jnp.float32)
        g2 = jnp.abs(jax.random.normal(k4, (dim,), jnp.float32)) + 0.5
        w1 = weight_norm(v1, g1)             # (dim*boom, dim//groups, K)
        w2 = weight_norm(v2, g2)             # (dim, dim*boom, 1)
        torch_params.append((w1, w2))
        w1_tap = grouped_conv_to_tap_matrices(w1, groups)            # (K, dim, dim*boom)
        w1_im2col = w1_tap.reshape(kernel_size * dim, dim * boom)    # (K*dim, dim*boom)
        w1_list.append(jnp.transpose(w1_im2col, (1, 0)))             # (dim*boom, K*dim)
        w2_list.append(w2[:, :, 0])                                  # (dim, dim*boom)
    w1_stack = jnp.stack(w1_list).astype(jnp.bfloat16)   # (depth, dim*boom, K*dim)
    w2_stack = jnp.stack(w2_list).astype(jnp.bfloat16)   # (depth, dim, dim*boom)
    return torch_params, (w1_stack, w2_stack)


# --------------------------------------------------------------------------
# Pure-JAX references for validation.
# --------------------------------------------------------------------------
def reference_stack_f32(x_ncl, torch_params, kernel_size, depth, groups):
    # PyTorch semantics, full f32.
    x = x_ncl
    for i in range(depth):
        w1, w2 = torch_params[i]
        d = 3 ** i
        pad = (kernel_size - 1) * d // 2
        h = _leaky(x)
        y = jax.lax.conv_general_dilated(
            h, w1, window_strides=(1,), padding=[(pad, pad)],
            rhs_dilation=(d,), dimension_numbers=('NCH', 'OIH', 'NCH'),
            feature_group_count=groups)
        h2 = _leaky(y)
        z = jax.lax.conv_general_dilated(
            h2, w2, window_strides=(1,), padding=[(0, 0)],
            dimension_numbers=('NCH', 'OIH', 'NCH'))
        x = z + x
    return x


def reference_stack_bf16(x_ncl, w1_stack, w2_stack, kernel_size, depth):
    # Plain-JAX mirror of the kernel math (bf16 matmul operands, f32 accumulate,
    # same lane-dense (C, B*L) layout).
    B, C, L = x_ncl.shape
    K = kernel_size
    x = jnp.transpose(x_ncl, (1, 0, 2)).reshape(C, B * L).astype(jnp.float32)
    for i in range(depth):
        d = 3 ** i
        pad = (K - 1) * d // 2
        h = _leaky(x)                                           # (C, B*L)
        hp = jnp.pad(h.reshape(C, B, L), ((0, 0), (0, 0), (pad, pad)))
        him_t = jnp.concatenate(
            [hp[:, :, k * d:k * d + L].reshape(C, B * L) for k in range(K)],
            axis=0).astype(jnp.bfloat16)                        # (K*C, B*L)
        y = jnp.dot(w1_stack[i], him_t, preferred_element_type=jnp.float32)
        h2 = _leaky(y).astype(jnp.bfloat16)
        z = jnp.dot(w2_stack[i], h2, preferred_element_type=jnp.float32)
        x = x + z
    return jnp.transpose(x.reshape(C, B, L), (1, 0, 2))


# --------------------------------------------------------------------------
if __name__ == "__main__":
    B, dim, L = 2, 16, 64
    kernel_size, boom, depth = 3, 2, 3
    groups = dim // min(dim, 16)  # = 1 for dim=16 (as in the nn.Module)

    key = jax.random.PRNGKey(0)
    key, kx = jax.random.split(key)
    x = jax.random.normal(kx, (B, dim, L), jnp.float32)  # PyTorch NCL input

    torch_params, (w1_stack, w2_stack) = make_params(
        key, dim, kernel_size, boom, depth, groups)

    fwd = jax.jit(functools.partial(residual_stack,
                                    kernel_size=kernel_size, depth=depth))
    out = jax.block_until_ready(fwd(x, w1_stack, w2_stack))
    assert out.shape == (B, dim, L)

    # Exact mirror of the kernel math (same bf16 operands / f32 accumulation).
    ref_mirror = reference_stack_bf16(x, w1_stack, w2_stack, kernel_size, depth)
    assert jnp.allclose(out, ref_mirror, atol=2e-3, rtol=2e-3), \
        "mismatch vs bf16 mirror reference"

    # PyTorch-semantics full-f32 reference; tolerance loosened for bf16 matmul
    # operands.
    ref_f32 = reference_stack_f32(x, torch_params, kernel_size, depth, groups)
    assert jnp.allclose(out, ref_f32, atol=1e-1, rtol=1e-1), \
        "mismatch vs f32 reference"

    print("KERNEL_OK")
</pallas_src>

<mosaic_0001>
module attributes {stable_mosaic.version = 11 : i64} {
  func.func @_stack_kernel(%arg0: i32, %arg1: memref<16x128xf32, #tpu.memory_space<vmem>>, %arg2: memref<3x32x48xbf16, #tpu.memory_space<vmem>>, %arg3: memref<3x16x32xbf16, #tpu.memory_space<vmem>>, %arg4: memref<16x128xf32, #tpu.memory_space<vmem>>, %arg5: memref<32x128xbf16, #tpu.memory_space<vmem>>) attributes {dimension_semantics = [#tpu.dimension_semantics<arbitrary>], iteration_bounds = array<i64: 1>, scalar_prefetch = 0 : i64, scratch_operands = 1 : i64, tpu.core_type = #tpu.core_type<tc>, window_params = [{pipeline_mode = #tpu.pipeline_mode<synchronous>, transform_indices = @transform_0, window_bounds = array<i64: 16, 128>}, {pipeline_mode = #tpu.pipeline_mode<synchronous>, transform_indices = @transform_1, window_bounds = array<i64: 3, 32, 48>}, {pipeline_mode = #tpu.pipeline_mode<synchronous>, transform_indices = @transform_2, window_bounds = array<i64: 3, 16, 32>}, {pipeline_mode = #tpu.pipeline_mode<synchronous>, transform_indices = @transform_3, window_bounds = array<i64: 16, 128>}]} {
    %cst = arith.constant 0.000000e+00 : bf16
    %0 = vector.broadcast %cst : bf16 to vector<32x32xbf16>
    %c0 = arith.constant 0 : index
    %c0_0 = arith.constant 0 : index
    %1 = vector.load %arg5[%c0, %c0_0] : memref<32x128xbf16, #tpu.memory_space<vmem>>, vector<32x32xbf16>
    tpu.vector_store %arg5[%c0, %c0_0], %0 {strides = array<i32>} : memref<32x128xbf16, #tpu.memory_space<vmem>>, vector<32x32xbf16>,
    %cst_1 = arith.constant 0.000000e+00 : bf16
    %2 = vector.broadcast %cst_1 : bf16 to vector<32x32xbf16>
    %c0_2 = arith.constant 0 : index
    %c96 = arith.constant 96 : index
    %3 = vector.load %arg5[%c0_2, %c96] : memref<32x128xbf16, #tpu.memory_space<vmem>>, vector<32x32xbf16>
    tpu.vector_store %arg5[%c0_2, %c96], %2 {strides = array<i32>} : memref<32x128xbf16, #tpu.memory_space<vmem>>, vector<32x32xbf16>,
    %c0_3 = arith.constant 0 : index
    %c0_4 = arith.constant 0 : index
    %4 = vector.load %arg1[%c0_3, %c0_4] : memref<16x128xf32, #tpu.memory_space<vmem>>, vector<16x128xf32>
    %cst_5 = arith.constant 0.000000e+00 : f32
    %5 = vector.broadcast %cst_5 : f32 to vector<16x128xf32>
    %6 = arith.cmpf ogt, %4, %5 : vector<16x128xf32>
    %cst_6 = arith.constant 2.000000e-01 : f32
    %7 = vector.broadcast %cst_6 : f32 to vector<16x128xf32>
    %8 = arith.mulf %7, %4 : vector<16x128xf32>
    %9 = arith.select %6, %4, %8 : vector<16x128xi1>, vector<16x128xf32>
    %10 = arith.truncf %9 : vector<16x128xf32> to vector<16x128xbf16>
    %11 = vector.extract_strided_slice %10 {offsets = [0, 0], sizes = [16, 64], strides = [1, 1]} : vector<16x128xbf16> to vector<16x64xbf16>
    %c0_7 = arith.constant 0 : index
    %c32 = arith.constant 32 : index
    %12 = vector.load %arg5[%c0_7, %c32] : memref<32x128xbf16, #tpu.memory_space<vmem>>, vector<16x64xbf16>
    tpu.vector_store %arg5[%c0_7, %c32], %11 {strides = array<i32>} : memref<32x128xbf16, #tpu.memory_space<vmem>>, vector<16x64xbf16>,
    %13 = vector.extract_strided_slice %10 {offsets = [0, 64], sizes = [16, 64], strides = [1, 1]} : vector<16x128xbf16> to vector<16x64xbf16>
    %c16 = arith.constant 16 : index
    %c32_8 = arith.constant 32 : index
    %14 = vector.load %arg5[%c16, %c32_8] : memref<32x128xbf16, #tpu.memory_space<vmem>>, vector<16x64xbf16>
    tpu.vector_store %arg5[%c16, %c32_8], %13 {strides = array<i32>} : memref<32x128xbf16, #tpu.memory_space<vmem>>, vector<16x64xbf16>,
    %c0_9 = arith.constant 0 : index
    %c31 = arith.constant 31 : index
    %15 = vector.load %arg5[%c0_9, %c31] : memref<32x128xbf16, #tpu.memory_space<vmem>>, vector<16x64xbf16>
    %c16_10 = arith.constant 16 : index
    %c31_11 = arith.constant 31 : index
    %16 = vector.load %arg5[%c16_10, %c31_11] : memref<32x128xbf16, #tpu.memory_space<vmem>>, vector<16x64xbf16>
    %17 = tpu.concatenate %15, %16 in 1 : vector<16x64xbf16>, vector<16x64xbf16> -> vector<16x128xbf16>
    %c0_12 = arith.constant 0 : index
    %c33 = arith.constant 33 : index
    %18 = vector.load %arg5[%c0_12, %c33] : memref<32x128xbf16, #tpu.memory_space<vmem>>, vector<16x64xbf16>
    %c16_13 = arith.constant 16 : index
    %c33_14 = arith.constant 33 : index
    %19 = vector.load %arg5[%c16_13, %c33_14] : memref<32x128xbf16, #tpu.memory_space<vmem>>, vector<16x64xbf16>
    %20 = tpu.concatenate %18, %19 in 1 : vector<16x64xbf16>, vector<16x64xbf16> -> vector<16x128xbf16>
    %21 = tpu.concatenate %17, %10, %20 in 0 : vector<16x128xbf16>, vector<16x128xbf16>, vector<16x128xbf16> -> vector<48x128xbf16>
    %c0_15 = arith.constant 0 : index
    %c0_16 = arith.constant 0 : index
    %c0_17 = arith.constant 0 : index
    %22 = vector.load %arg2[%c0_15, %c0_16, %c0_17] : memref<3x32x48xbf16, #tpu.memory_space<vmem>>, vector<1x32x48xbf16>
    %23 = vector.shape_cast %22 : vector<1x32x48xbf16> to vector<32x48xbf16>
    %cst_18 = arith.constant dense<0.000000e+00> : vector<32x128xf32>
    %24 = tpu.matmul %23, %21, %cst_18 {dimension_numbers = #tpu.dot_dimension_numbers<[1], [0], [0], [1], [0, 0, 1, 1], [], []>} : vector<32x48xbf16>, vector<48x128xbf16>, vector<32x128xf32> -> vector<32x128xf32>
    %cst_19 = arith.constant 0.000000e+00 : f32
    %25 = vector.broadcast %cst_19 : f32 to vector<32x128xf32>
    %26 = arith.cmpf ogt, %24, %25 : vector<32x128xf32>
    %cst_20 = arith.constant 2.000000e-01 : f32
    %27 = vector.broadcast %cst_20 : f32 to vector<32x128xf32>
    %28 = arith.mulf %27, %24 : vector<32x128xf32>
    %29 = arith.select %26, %24, %28 : vector<32x128xi1>, vector<32x128xf32>
    %30 = arith.truncf %29 : vector<32x128xf32> to vector<32x128xbf16>
    %c0_21 = arith.constant 0 : index
    %c0_22 = arith.constant 0 : index
    %c0_23 = arith.constant 0 : index
    %31 = vector.load %arg3[%c0_21, %c0_22, %c0_23] : memref<3x16x32xbf16, #tpu.memory_space<vmem>>, vector<1x16x32xbf16>
    %32 = vector.shape_cast %31 : vector<1x16x32xbf16> to vector<16x32xbf16>
    %cst_24 = arith.constant dense<0.000000e+00> : vector<16x128xf32>
    %33 = tpu.matmul %32, %30, %cst_24 {dimension_numbers = #tpu.dot_dimension_numbers<[1], [0], [0], [1], [0, 0, 1, 1], [], []>} : vector<16x32xbf16>, vector<32x128xbf16>, vector<16x128xf32> -> vector<16x128xf32>
    %34 = arith.addf %4, %33 : vector<16x128xf32>
    %cst_25 = arith.constant 0.000000e+00 : f32
    %35 = vector.broadcast %cst_25 : f32 to vector<16x128xf32>
    %36 = arith.cmpf ogt, %34, %35 : vector<16x128xf32>
    %cst_26 = arith.constant 2.000000e-01 : f32
    %37 = vector.broadcast %cst_26 : f32 to vector<16x128xf32>
    %38 = arith.mulf %37, %34 : vector<16x128xf32>
    %39 = arith.select %36, %34, %38 : vector<16x128xi1>, vector<16x128xf32>
    %40 = arith.truncf %39 : vector<16x128xf32> to vector<16x128xbf16>
    %41 = vector.extract_strided_slice %40 {offsets = [0, 0], sizes = [16, 64], strides = [1, 1]} : vector<16x128xbf16> to vector<16x64xbf16>
    %c0_27 = arith.constant 0 : index
    %c32_28 = arith.constant 32 : index
    %42 = vector.load %arg5[%c0_27, %c32_28] : memref<32x128xbf16, #tpu.memory_space<vmem>>, vector<16x64xbf16>
    tpu.vector_store %arg5[%c0_27, %c32_28], %41 {strides = array<i32>} : memref<32x128xbf16, #tpu.memory_space<vmem>>, vector<16x64xbf16>,
    %43 = vector.extract_strided_slice %40 {offsets = [0, 64], sizes = [16, 64], strides = [1, 1]} : vector<16x128xbf16> to vector<16x64xbf16>
    %c16_29 = arith.constant 16 : index
    %c32_30 = arith.constant 32 : index
    %44 = vector.load %arg5[%c16_29, %c32_30] : memref<32x128xbf16, #tpu.memory_space<vmem>>, vector<16x64xbf16>
    tpu.vector_store %arg5[%c16_29, %c32_30], %43 {strides = array<i32>} : memref<32x128xbf16, #tpu.memory_space<vmem>>, vector<16x64xbf16>,
    %c0_31 = arith.constant 0 : index
    %c29 = arith.constant 29 : index
    %45 = vector.load %arg5[%c0_31, %c29] : memref<32x128xbf16, #tpu.memory_space<vmem>>, vector<16x64xbf16>
    %c16_32 = arith.constant 16 : index
    %c29_33 = arith.constant 29 : index
    %46 = vector.load %arg5[%c16_32, %c29_33] : memref<32x128xbf16, #tpu.memory_space<vmem>>, vector<16x64xbf16>
    %47 = tpu.concatenate %45, %46 in 1 : vector<16x64xbf16>, vector<16x64xbf16> -> vector<16x128xbf16>
    %c0_34 = arith.constant 0 : index
    %c35 = arith.constant 35 : index
    %48 = vector.load %arg5[%c0_34, %c35] : memref<32x128xbf16, #tpu.memory_space<vmem>>, vector<16x64xbf16>
    %c16_35 = arith.constant 16 : index
    %c35_36 = arith.constant 35 : index
    %49 = vector.load %arg5[%c16_35, %c35_36] : memref<32x128xbf16, #tpu.memory_space<vmem>>, vector<16x64xbf16>
    %50 = tpu.concatenate %48, %49 in 1 : vector<16x64xbf16>, vector<16x64xbf16> -> vector<16x128xbf16>
    %51 = tpu.concatenate %47, %40, %50 in 0 : vector<16x128xbf16>, vector<16x128xbf16>, vector<16x128xbf16> -> vector<48x128xbf16>
    %c1 = arith.constant 1 : index
    %c0_37 = arith.constant 0 : index
    %c0_38 = arith.constant 0 : index
    %52 = vector.load %arg2[%c1, %c0_37, %c0_38] : memref<3x32x48xbf16, #tpu.memory_space<vmem>>, vector<1x32x48xbf16>
    %53 = vector.shape_cast %52 : vector<1x32x48xbf16> to vector<32x48xbf16>
    %cst_39 = arith.constant dense<0.000000e+00> : vector<32x128xf32>
    %54 = tpu.matmul %53, %51, %cst_39 {dimension_numbers = #tpu.dot_dimension_numbers<[1], [0], [0], [1], [0, 0, 1, 1], [], []>} : vector<32x48xbf16>, vector<48x128xbf16>, vector<32x128xf32> -> vector<32x128xf32>
    %cst_40 = arith.constant 0.000000e+00 : f32
    %55 = vector.broadcast %cst_40 : f32 to vector<32x128xf32>
    %56 = arith.cmpf ogt, %54, %55 : vector<32x128xf32>
    %cst_41 = arith.constant 2.000000e-01 : f32
    %57 = vector.broadcast %cst_41 : f32 to vector<32x128xf32>
    %58 = arith.mulf %57, %54 : vector<32x128xf32>
    %59 = arith.select %56, %54, %58 : vector<32x128xi1>, vector<32x128xf32>
    %60 = arith.truncf %59 : vector<32x128xf32> to vector<32x128xbf16>
    %c1_42 = arith.constant 1 : index
    %c0_43 = arith.constant 0 : index
    %c0_44 = arith.constant 0 : index
    %61 = vector.load %arg3[%c1_42, %c0_43, %c0_44] : memref<3x16x32xbf16, #tpu.memory_space<vmem>>, vector<1x16x32xbf16>
    %62 = vector.shape_cast %61 : vector<1x16x32xbf16> to vector<16x32xbf16>
    %cst_45 = arith.constant dense<0.000000e+00> : vector<16x128xf32>
    %63 = tpu.matmul %62, %60, %cst_45 {dimension_numbers = #tpu.dot_dimension_numbers<[1], [0], [0], [1], [0, 0, 1, 1], [], []>} : vector<16x32xbf16>, vector<32x128xbf16>, vector<16x128xf32> -> vector<16x128xf32>
    %64 = arith.addf %34, %63 : vector<16x128xf32>
    %cst_46 = arith.constant 0.000000e+00 : f32
    %65 = vector.broadcast %cst_46 : f32 to vector<16x128xf32>
    %66 = arith.cmpf ogt, %64, %65 : vector<16x128xf32>
    %cst_47 = arith.constant 2.000000e-01 : f32
    %67 = vector.broadcast %cst_47 : f32 to vector<16x128xf32>
    %68 = arith.mulf %67, %64 : vector<16x128xf32>
    %69 = arith.select %66, %64, %68 : vector<16x128xi1>, vector<16x128xf32>
    %70 = arith.truncf %69 : vector<16x128xf32> to vector<16x128xbf16>
    %71 = vector.extract_strided_slice %70 {offsets = [0, 0], sizes = [16, 64], strides = [1, 1]} : vector<16x128xbf16> to vector<16x64xbf16>
    %c0_48 = arith.constant 0 : index
    %c32_49 = arith.constant 32 : index
    %72 = vector.load %arg5[%c0_48, %c32_49] : memref<32x128xbf16, #tpu.memory_space<vmem>>, vector<16x64xbf16>
    tpu.vector_store %arg5[%c0_48, %c32_49], %71 {strides = array<i32>} : memref<32x128xbf16, #tpu.memory_space<vmem>>, vector<16x64xbf16>,
    %73 = vector.extract_strided_slice %70 {offsets = [0, 64], sizes = [16, 64], strides = [1, 1]} : vector<16x128xbf16> to vector<16x64xbf16>
    %c16_50 = arith.constant 16 : index
    %c32_51 = arith.constant 32 : index
    %74 = vector.load %arg5[%c16_50, %c32_51] : memref<32x128xbf16, #tpu.memory_space<vmem>>, vector<16x64xbf16>
    tpu.vector_store %arg5[%c16_50, %c32_51], %73 {strides = array<i32>} : memref<32x128xbf16, #tpu.memory_space<vmem>>, vector<16x64xbf16>,
    %c0_52 = arith.constant 0 : index
    %c23 = arith.constant 23 : index
    %75 = vector.load %arg5[%c0_52, %c23] : memref<32x128xbf16, #tpu.memory_space<vmem>>, vector<16x64xbf16>
    %c16_53 = arith.constant 16 : index
    %c23_54 = arith.constant 23 : index
    %76 = vector.load %arg5[%c16_53, %c23_54] : memref<32x128xbf16, #tpu.memory_space<vmem>>, vector<16x64xbf16>
    %77 = tpu.concatenate %75, %76 in 1 : vector<16x64xbf16>, vector<16x64xbf16> -> vector<16x128xbf16>
    %c0_55 = arith.constant 0 : index
    %c41 = arith.constant 41 : index
    %78 = vector.load %arg5[%c0_55, %c41] : memref<32x128xbf16, #tpu.memory_space<vmem>>, vector<16x64xbf16>
    %c16_56 = arith.constant 16 : index
    %c41_57 = arith.constant 41 : index
    %79 = vector.load %arg5[%c16_56, %c41_57] : memref<32x128xbf16, #tpu.memory_space<vmem>>, vector<16x64xbf16>
    %80 = tpu.concatenate %78, %79 in 1 : vector<16x64xbf16>, vector<16x64xbf16> -> vector<16x128xbf16>
    %81 = tpu.concatenate %77, %70, %80 in 0 : vector<16x128xbf16>, vector<16x128xbf16>, vector<16x128xbf16> -> vector<48x128xbf16>
    %c2 = arith.constant 2 : index
    %c0_58 = arith.constant 0 : index
    %c0_59 = arith.constant 0 : index
    %82 = vector.load %arg2[%c2, %c0_58, %c0_59] : memref<3x32x48xbf16, #tpu.memory_space<vmem>>, vector<1x32x48xbf16>
    %83 = vector.shape_cast %82 : vector<1x32x48xbf16> to vector<32x48xbf16>
    %cst_60 = arith.constant dense<0.000000e+00> : vector<32x128xf32>
    %84 = tpu.matmul %83, %81, %cst_60 {dimension_numbers = #tpu.dot_dimension_numbers<[1], [0], [0], [1], [0, 0, 1, 1], [], []>} : vector<32x48xbf16>, vector<48x128xbf16>, vector<32x128xf32> -> vector<32x128xf32>
    %cst_61 = arith.constant 0.000000e+00 : f32
    %85 = vector.broadcast %cst_61 : f32 to vector<32x128xf32>
    %86 = arith.cmpf ogt, %84, %85 : vector<32x128xf32>
    %cst_62 = arith.constant 2.000000e-01 : f32
    %87 = vector.broadcast %cst_62 : f32 to vector<32x128xf32>
    %88 = arith.mulf %87, %84 : vector<32x128xf32>
    %89 = arith.select %86, %84, %88 : vector<32x128xi1>, vector<32x128xf32>
    %90 = arith.truncf %89 : vector<32x128xf32> to vector<32x128xbf16>
    %c2_63 = arith.constant 2 : index
    %c0_64 = arith.constant 0 : index
    %c0_65 = arith.constant 0 : index
    %91 = vector.load %arg3[%c2_63, %c0_64, %c0_65] : memref<3x16x32xbf16, #tpu.memory_space<vmem>>, vector<1x16x32xbf16>
    %92 = vector.shape_cast %91 : vector<1x16x32xbf16> to vector<16x32xbf16>
    %cst_66 = arith.constant dense<0.000000e+00> : vector<16x128xf32>
    %93 = tpu.matmul %92, %90, %cst_66 {dimension_numbers = #tpu.dot_dimension_numbers<[1], [0], [0], [1], [0, 0, 1, 1], [], []>} : vector<16x32xbf16>, vector<32x128xbf16>, vector<16x128xf32> -> vector<16x128xf32>
    %94 = arith.addf %64, %93 : vector<16x128xf32>
    %c0_67 = arith.constant 0 : index
    %c0_68 = arith.constant 0 : index
    %95 = vector.load %arg4[%c0_67, %c0_68] : memref<16x128xf32, #tpu.memory_space<vmem>>, vector<16x128xf32>
    tpu.vector_store %arg4[%c0_67, %c0_68], %94 {strides = array<i32>} : memref<16x128xf32, #tpu.memory_space<vmem>>, vector<16x128xf32>,
    return
  }
  func.func @transform_0(%arg0: i32) -> (i32, i32) {
    %c0_i32 = arith.constant 0 : i32
    %c0_i32_0 = arith.constant 0 : i32
    %c0_i32_1 = arith.constant 0 : i32
    return %c0_i32, %c0_i32_0 : i32, i32
  }
  func.func @transform_1(%arg0: i32) -> (i32, i32, i32) {
    %c0_i32 = arith.constant 0 : i32
    %c0_i32_0 = arith.constant 0 : i32
    %c0_i32_1 = arith.constant 0 : i32
    %c0_i32_2 = arith.constant 0 : i32
    return %c0_i32, %c0_i32_0, %c0_i32_1 : i32, i32, i32
  }
  func.func @transform_2(%arg0: i32) -> (i32, i32, i32) {
    %c0_i32 = arith.constant 0 : i32
    %c0_i32_0 = arith.constant 0 : i32
    %c0_i32_1 = arith.constant 0 : i32
    %c0_i32_2 = arith.constant 0 : i32
    return %c0_i32, %c0_i32_0, %c0_i32_1 : i32, i32, i32
  }
  func.func @transform_3(%arg0: i32) -> (i32, i32) {
    %c0_i32 = arith.constant 0 : i32
    %c0_i32_0 = arith.constant 0 : i32
    %c0_i32_1 = arith.constant 0 : i32
    return %c0_i32, %c0_i32_0 : i32, i32
  }
}

</mosaic_0001>

<llo_original>
// kernel: residual_stack.1
$region0: #{residual_stack.1}
  #allocation0 [shape = 'u32[]', space=smem, size = 0x4, offset = 0x4, fixed_abs, tag = 'smem constant byte address 0x4 - core index']
  #allocation1 [shape = 'u32[144,128]{1,0:T(1,128)}', space=vmem, size = 0x12000, scoped, tag = 'internal scratch']
  #allocation2 [shape = 'bf16[32,128]{1,0:T(8,128)(2,1)}', space=vmem, size = 0x2000, scoped, tag = 'scratch operand']
  %s0 = inlined_call_operand.vmem [shape: f32[16,128], index: 0, kind: input, shape index: {}]
  %s1 = inlined_call_operand.vmem [shape: bf16[3,32,48], index: 1, kind: input, shape index: {}]
  %s2 = inlined_call_operand.vmem [shape: bf16[3,16,32], index: 2, kind: input, shape index: {}]
  %s3 = inlined_call_operand.vmem [shape: f32[16,128], index: 3, kind: output, shape index: {}]
  %s4 = sld [smem:[#allocation0]]
  $region22: #{residual_stack.1} parent=0
    _
  %s6 = ssub.s32 1, %s4
  %s7 = scalar_select 0, %s6, %s4
  // Predicated region
  $region2: #{residual_stack.1} parent=0 // pred_check
    _
  $region3: #{residual_stack.1} parent=0 // pred_check_branch
    %9 = sbr.rel (0) target = $region5
  $region4: #{residual_stack.1} parent=0 // pred_region
    _
  $region5: #{residual_stack.1} parent=0 // pred_fallthru
    _
  // Predicated region
  $region6: #{residual_stack.1} parent=0 // pred_check
    _
  $region7: #{residual_stack.1} parent=0 // pred_check_branch
    %11 = sbr.rel (0) target = $region9
  $region8: #{residual_stack.1} parent=0 // pred_region
    _
  $region9: #{residual_stack.1} parent=0 // pred_fallthru
    _
  // Predicated region
  $region10: #{residual_stack.1} parent=0 // pred_check
    _
  $region11: #{residual_stack.1} parent=0 // pred_check_branch
    %13 = sbr.rel (0) target = $region13
  $region12: #{residual_stack.1} parent=0 // pred_region
    _
  $region13: #{residual_stack.1} parent=0 // pred_fallthru
    _
  %vm15 = vcmask 257024
  %16 = vst.msk [vmem:[#allocation2] sm:$0xf] %vm15, 0
  %17 = vst.msk [vmem:[#allocation2 + $0x4] sm:$0xf] %vm15, 0
  %18 = vst.msk [vmem:[#allocation2 + $0x8] sm:$0xf] %vm15, 0
  %19 = vst.msk [vmem:[#allocation2 + $0xc] sm:$0xf] %vm15, 0
  %vm20 = vcmask 1044224
  %21 = vst.msk [vmem:[#allocation2] sm:$0xf] %vm20, 0
  %22 = vst.msk [vmem:[#allocation2 + $0x4] sm:$0xf] %vm20, 0
  %23 = vst.msk [vmem:[#allocation2 + $0x8] sm:$0xf] %vm20, 0
  %24 = vst.msk [vmem:[#allocation2 + $0xc] sm:$0xf] %vm20, 0
  %v25 = vld [vmem:[%s0] sm:$0xff]
  %v26 = vld [vmem:[%s0 + $0x8] sm:$0xff]
  %vm27 = vcmp.gt.f32.partialorder %v25, 0.0
  %vm28 = vcmp.gt.f32.partialorder %v26, 0.0
  %v29 = vmul.f32 %v25, 0.2
  %v30 = vmul.f32 %v26, 0.2
  %v31 = vsel %vm27, %v25, %v29
  %v32 = vsel %vm28, %v26, %v30
  %v33 = vpack.c.bf16 %v32, %v31
  %v35 = vunpack.c.l.b16 %v33
  %v36 = vunpack.c.h.b16 %v33
  %v37 = vpack.c.b16 %v35, %v35
  %v38 = vpack.c.b16 %v36, %v36
  %39 = vrot.lane.b32.xlu0 %v37, 32
  %v40 = vpop.permute.xlu0 %39
  %41 = vrot.lane.b32.xlu0 %v38, 32
  %v42 = vpop.permute.xlu0 %41
  %vm45 = vcmask 781568
  %46 = vst.msk [vmem:[#allocation2] sm:$0xf] %vm45, %v40
  %47 = vst.msk [vmem:[#allocation2 + $0x4] sm:$0xf] %vm45, %v42
  %48 = vrot.lane.b32.xlu0 %v37, 96
  %v49 = vpop.permute.xlu0 %48
  %50 = vrot.lane.b32.xlu0 %v38, 96
  %v51 = vpop.permute.xlu0 %50
  %54 = vst.msk [vmem:[#allocation2 + $0x8] sm:$0xf] %vm45, %v49
  %55 = vst.msk [vmem:[#allocation2 + $0xc] sm:$0xf] %vm45, %v51
  %v56 = vld [vmem:[#allocation2] sm:$0xf]
  %v57 = vld [vmem:[#allocation2 + $0x4] sm:$0xf]
  %v58 = vld [vmem:[#allocation2 + $0x8] sm:$0xf]
  %v59 = vld [vmem:[#allocation2 + $0xc] sm:$0xf]
  %v62 = vunpack.c.l.b16 %v56
  %v63 = vunpack.c.l.b16 %v57
  %v64 = vpack.c.b16 %v63, %v62
  %65 = vrot.lane.b32.xlu0 %v64, 97
  %v66 = vpop.permute.xlu0 %65
  %v69 = vunpack.c.l.b16 %v58
  %v70 = vunpack.c.l.b16 %v59
  %v71 = vpack.c.b16 %v70, %v69
  %72 = vrot.lane.b32.xlu0 %v71, 33
  %v73 = vpop.permute.xlu0 %72
  %vm74 = vcmask 523264
  %v77 = vsel %vm74, %v66, %v73
  %79 = vrot.lane.b32.xlu0 %v64, 95
  %v80 = vpop.permute.xlu0 %79
  %81 = vrot.lane.b32.xlu0 %v71, 31
  %v82 = vpop.permute.xlu0 %81
  %v85 = vsel %vm74, %v80, %v82
  %v87 = vld [vmem:[%s1] sm:$0xf]
  %v88 = vld [vmem:[%s1 + $0x4] sm:$0xf]
  %v89 = vld [vmem:[%s1 + $0x8] sm:$0xf]
  %v90 = vld [vmem:[%s1 + $0xc] sm:$0xf]
  %v95 = vunpack.c.l.b16 %v87
  %v96 = vunpack.c.l.b16 %v88
  %v97 = vunpack.c.l.b16 %v89
  %v98 = vunpack.c.l.b16 %v90
  %v99 = vpack.c.b16 %v96, %v95
  %v100 = vpack.c.b16 %v98, %v97
  %vm101 = vcmask 392192
  %v103 = vsel %vm101, %v99, 0
  %v106 = vsel %vm101, %v100, 0
  %108 = vmatprep.subr.bf16.mxu0 0
  %109 = vmatpush1.bf16.msra.mxu0 0
  %110 = vmatprep.subr.bf16.mxu0 0
  %111 = vmatpush1.bf16.msra.mxu0 0
  %112 = vmatprep.subr.bf16.mxu0 0
  %113 = vmatpush1.bf16.msra.mxu0 0
  %114 = vmatprep.subr.bf16.mxu0 0
  %115 = vmatpush1.bf16.msra.mxu0 0
  %116 = vmatprep.subr.bf16.mxu0 0
  %117 = vmatpush1.bf16.msra.mxu0 0
  %118 = vmatprep.subr.bf16.mxu0 0
  %119 = vmatpush1.bf16.msra.mxu0 %v85
  %120 = vmatprep.subr.bf16.mxu0 0
  %121 = vmatpush1.bf16.msra.mxu0 %v33
  %122 = vmatprep.subr.bf16.mxu0 0
  %123 = vmatpush1.bf16.msra.mxu0 %v77
  %124 = vmatprep.subr.bf16.mxu0 0
  %125 = vmatpush2.bf16.msra.mxu0 0
  %126 = vmatprep.subr.bf16.mxu0 0
  %127 = vmatpush2.bf16.msra.mxu0 0
  %128 = vmatprep.subr.bf16.mxu0 0
  %129 = vmatpush2.bf16.msra.mxu0 0
  %130 = vmatprep.subr.bf16.mxu0 0
  %131 = vmatpush2.bf16.msra.mxu0 0
  %132 = vmatprep.subr.bf16.mxu0 0
  %133 = vmatpush2.bf16.msra.mxu0 0
  %134 = vmatprep.subr.bf16.mxu0 0
  %135 = vmatpush2.bf16.msra.mxu0 0
  %136 = vmatprep.subr.bf16.mxu0 0
  %137 = vmatpush2.bf16.msra.mxu0 0
  %138 = vmatprep.subr.bf16.mxu0 0
  %139 = vmatpush2.bf16.msra.mxu0 0
  %140 = vmatprep.mubr.bf16.mxu0 0
  %141 = vmatmul.mubr.bf16.gmra.mxu0 %v103
  %v142 = vpop.f32.mrf.mxu0
  %v143 = vadd.f32 0.0, %v142
  %v144 = vpop.f32.mrf.mxu0
  %v145 = vpop.f32.mrf.mxu0
  %v146 = vadd.f32 0.0, %v145
  %v147 = vpop.f32.mrf.mxu0
  %148 = vmatprep.mubr.bf16.mxu0 0
  %149 = vmatmul.mubr.bf16.gmra.mxu0 %v106
  %v150 = vpop.f32.mrf.mxu0
  %v151 = vadd.f32 0.0, %v150
  %v152 = vpop.f32.mrf.mxu0
  %v153 = vpop.f32.mrf.mxu0
  %v154 = vadd.f32 0.0, %v153
  %v155 = vpop.f32.mrf.mxu0
  %156 = vdwg.mxu0
  %vm157 = vcmp.gt.f32.partialorder %v143, 0.0
  %vm158 = vcmp.gt.f32.partialorder %v146, 0.0
  %vm159 = vcmp.gt.f32.partialorder %v151, 0.0
  %vm160 = vcmp.gt.f32.partialorder %v154, 0.0
  %v161 = vmul.f32 %v143, 0.2
  %v162 = vmul.f32 %v146, 0.2
  %v163 = vmul.f32 %v151, 0.2
  %v164 = vmul.f32 %v154, 0.2
  %v165 = vsel %vm157, %v143, %v161
  %v166 = vsel %vm158, %v146, %v162
  %v167 = vsel %vm159, %v151, %v163
  %v168 = vsel %vm160, %v154, %v164
  %v169 = vpack.c.bf16 %v166, %v165
  %v170 = vpack.c.bf16 %v168, %v167
  %v171 = vld [vmem:[%s2] sm:$0xf]
  %v172 = vld [vmem:[%s2 + $0x4] sm:$0xf]
  %v175 = vunpack.c.l.b16 %v171
  %v176 = vunpack.c.l.b16 %v172
  %v177 = vpack.c.b16 %v176, %v175
  %vm178 = vcmask 261120
  %v180 = vsel %vm178, %v177, 0
  %182 = vmatprep.subr.bf16.mxu0 0
  %183 = vmatpush1.bf16.msra.mxu0 0
  %184 = vmatprep.subr.bf16.mxu0 0
  %185 = vmatpush1.bf16.msra.mxu0 0
  %186 = vmatprep.subr.bf16.mxu0 0
  %187 = vmatpush1.bf16.msra.mxu0 0
  %188 = vmatprep.subr.bf16.mxu0 0
  %189 = vmatpush1.bf16.msra.mxu0 0
  %190 = vmatprep.subr.bf16.mxu0 0
  %191 = vmatpush1.bf16.msra.mxu0 0
  %192 = vmatprep.subr.bf16.mxu0 0
  %193 = vmatpush1.bf16.msra.mxu0 0
  %194 = vmatprep.subr.bf16.mxu0 0
  %195 = vmatpush1.bf16.msra.mxu0 %v170
  %196 = vmatprep.subr.bf16.mxu0 0
  %197 = vmatpush1.bf16.msra.mxu0 %v169
  %198 = vmatprep.subr.bf16.mxu0 0
  %199 = vmatpush2.bf16.msra.mxu0 0
  %200 = vmatprep.subr.bf16.mxu0 0
  %201 = vmatpush2.bf16.msra.mxu0 0
  %202 = vmatprep.subr.bf16.mxu0 0
  %203 = vmatpush2.bf16.msra.mxu0 0
  %204 = vmatprep.subr.bf16.mxu0 0
  %205 = vmatpush2.bf16.msra.mxu0 0
  %206 = vmatprep.subr.bf16.mxu0 0
  %207 = vmatpush2.bf16.msra.mxu0 0
  %208 = vmatprep.subr.bf16.mxu0 0
  %209 = vmatpush2.bf16.msra.mxu0 0
  %210 = vmatprep.subr.bf16.mxu0 0
  %211 = vmatpush2.bf16.msra.mxu0 0
  %212 = vmatprep.subr.bf16.mxu0 0
  %213 = vmatpush2.bf16.msra.mxu0 0
  %214 = vmatprep.mubr.bf16.mxu0 0
  %215 = vmatmul.mubr.bf16.gmra.mxu0 %v180
  %v216 = vpop.f32.mrf.mxu0
  %v217 = vadd.f32 0.0, %v216
  %v218 = vpop.f32.mrf.mxu0
  %v219 = vpop.f32.mrf.mxu0
  %v220 = vadd.f32 0.0, %v219
  %v221 = vpop.f32.mrf.mxu0
  %222 = vdwg.mxu0
  %v223 = vadd.f32 %v25, %v217
  %v224 = vadd.f32 %v26, %v220
  %vm225 = vcmp.gt.f32.partialorder %v223, 0.0
  %vm226 = vcmp.gt.f32.partialorder %v224, 0.0
  %v227 = vmul.f32 %v223, 0.2
  %v228 = vmul.f32 %v224, 0.2
  %v229 = vsel %vm225, %v223, %v227
  %v230 = vsel %vm226, %v224, %v228
  %v231 = vpack.c.bf16 %v230, %v229
  %v233 = vunpack.c.l.b16 %v231
  %v234 = vunpack.c.h.b16 %v231
  %v235 = vpack.c.b16 %v233, %v233
  %v236 = vpack.c.b16 %v234, %v234
  %237 = vrot.lane.b32.xlu0 %v235, 32
  %v238 = vpop.permute.xlu0 %237
  %239 = vrot.lane.b32.xlu0 %v236, 32
  %v240 = vpop.permute.xlu0 %239
  %243 = vst.msk [vmem:[#allocation2] sm:$0xf] %vm45, %v238
  %244 = vst.msk [vmem:[#allocation2 + $0x4] sm:$0xf] %vm45, %v240
  %245 = vrot.lane.b32.xlu0 %v235, 96
  %v246 = vpop.permute.xlu0 %245
  %247 = vrot.lane.b32.xlu0 %v236, 96
  %v248 = vpop.permute.xlu0 %247
  %251 = vst.msk [vmem:[#allocation2 + $0x8] sm:$0xf] %vm45, %v246
  %252 = vst.msk [vmem:[#allocation2 + $0xc] sm:$0xf] %vm45, %v248
  %v253 = vld [vmem:[#allocation2] sm:$0xf]
  %v254 = vld [vmem:[#allocation2 + $0x4] sm:$0xf]
  %v255 = vld [vmem:[#allocation2 + $0x8] sm:$0xf]
  %v256 = vld [vmem:[#allocation2 + $0xc] sm:$0xf]
  %v259 = vunpack.c.l.b16 %v253
  %v260 = vunpack.c.l.b16 %v254
  %v261 = vpack.c.b16 %v260, %v259
  %262 = vrot.lane.b32.xlu0 %v261, 99
  %v263 = vpop.permute.xlu0 %262
  %v266 = vunpack.c.l.b16 %v255
  %v267 = vunpack.c.l.b16 %v256
  %v268 = vpack.c.b16 %v267, %v266
  %269 = vrot.lane.b32.xlu0 %v268, 35
  %v270 = vpop.permute.xlu0 %269
  %v273 = vsel %vm74, %v263, %v270
  %275 = vrot.lane.b32.xlu0 %v261, 93
  %v276 = vpop.permute.xlu0 %275
  %277 = vrot.lane.b32.xlu0 %v268, 29
  %v278 = vpop.permute.xlu0 %277
  %v281 = vsel %vm74, %v276, %v278
  %s283 = scalar_lea.vmem %s1, 16
  %v284 = vld [vmem:[%s283] sm:$0xf]
  %v285 = vld [vmem:[%s283 + $0x4] sm:$0xf]
  %v286 = vld [vmem:[%s283 + $0x8] sm:$0xf]
  %v287 = vld [vmem:[%s283 + $0xc] sm:$0xf]
  %v292 = vunpack.c.l.b16 %v284
  %v293 = vunpack.c.l.b16 %v285
  %v294 = vunpack.c.l.b16 %v286
  %v295 = vunpack.c.l.b16 %v287
  %v296 = vpack.c.b16 %v293, %v292
  %v297 = vpack.c.b16 %v295, %v294
  %v299 = vsel %vm101, %v296, 0
  %v302 = vsel %vm101, %v297, 0
  %304 = vmatprep.subr.bf16.mxu0 0
  %305 = vmatpush1.bf16.msra.mxu0 0
  %306 = vmatprep.subr.bf16.mxu0 0
  %307 = vmatpush1.bf16.msra.mxu0 0
  %308 = vmatprep.subr.bf16.mxu0 0
  %309 = vmatpush1.bf16.msra.mxu0 0
  %310 = vmatprep.subr.bf16.mxu0 0
  %311 = vmatpush1.bf16.msra.mxu0 0
  %312 = vmatprep.subr.bf16.mxu0 0
  %313 = vmatpush1.bf16.msra.mxu0 0
  %314 = vmatprep.subr.bf16.mxu0 0
  %315 = vmatpush1.bf16.msra.mxu0 %v281
  %316 = vmatprep.subr.bf16.mxu0 0
  %317 = vmatpush1.bf16.msra.mxu0 %v231
  %318 = vmatprep.subr.bf16.mxu0 0
  %319 = vmatpush1.bf16.msra.mxu0 %v273
  %320 = vmatprep.subr.bf16.mxu0 0
  %321 = vmatpush2.bf16.msra.mxu0 0
  %322 = vmatprep.subr.bf16.mxu0 0
  %323 = vmatpush2.bf16.msra.mxu0 0
  %324 = vmatprep.subr.bf16.mxu0 0
  %325 = vmatpush2.bf16.msra.mxu0 0
  %326 = vmatprep.subr.bf16.mxu0 0
  %327 = vmatpush2.bf16.msra.mxu0 0
  %328 = vmatprep.subr.bf16.mxu0 0
  %329 = vmatpush2.bf16.msra.mxu0 0
  %330 = vmatprep.subr.bf16.mxu0 0
  %331 = vmatpush2.bf16.msra.mxu0 0
  %332 = vmatprep.subr.bf16.mxu0 0
  %333 = vmatpush2.bf16.msra.mxu0 0
  %334 = vmatprep.subr.bf16.mxu0 0
  %335 = vmatpush2.bf16.msra.mxu0 0
  %336 = vmatprep.mubr.bf16.mxu0 0
  %337 = vmatmul.mubr.bf16.gmra.mxu0 %v299
  %v338 = vpop.f32.mrf.mxu0
  %v339 = vadd.f32 0.0, %v338
  %v340 = vpop.f32.mrf.mxu0
  %v341 = vpop.f32.mrf.mxu0
  %v342 = vadd.f32 0.0, %v341
  %v343 = vpop.f32.mrf.mxu0
  %344 = vmatprep.mubr.bf16.mxu0 0
  %345 = vmatmul.mubr.bf16.gmra.mxu0 %v302
  %v346 = vpop.f32.mrf.mxu0
  %v347 = vadd.f32 0.0, %v346
  %v348 = vpop.f32.mrf.mxu0
  %v349 = vpop.f32.mrf.mxu0
  %v350 = vadd.f32 0.0, %v349
  %v351 = vpop.f32.mrf.mxu0
  %352 = vdwg.mxu0
  %vm353 = vcmp.gt.f32.partialorder %v339, 0.0
  %vm354 = vcmp.gt.f32.partialorder %v342, 0.0
  %vm355 = vcmp.gt.f32.partialorder %v347, 0.0
  %vm356 = vcmp.gt.f32.partialorder %v350, 0.0
  %v357 = vmul.f32 %v339, 0.2
  %v358 = vmul.f32 %v342, 0.2
  %v359 = vmul.f32 %v347, 0.2
  %v360 = vmul.f32 %v350, 0.2
  %v361 = vsel %vm353, %v339, %v357
  %v362 = vsel %vm354, %v342, %v358
  %v363 = vsel %vm355, %v347, %v359
  %v364 = vsel %vm356, %v350, %v360
  %v365 = vpack.c.bf16 %v362, %v361
  %v366 = vpack.c.bf16 %v364, %v363
  %s367 = scalar_lea.vmem %s2, 8
  %v368 = vld [vmem:[%s367] sm:$0xf]
  %v369 = vld [vmem:[%s367 + $0x4] sm:$0xf]
  %v372 = vunpack.c.l.b16 %v368
  %v373 = vunpack.c.l.b16 %v369
  %v374 = vpack.c.b16 %v373, %v372
  %v376 = vsel %vm178, %v374, 0
  %378 = vmatprep.subr.bf16.mxu0 0
  %379 = vmatpush1.bf16.msra.mxu0 0
  %380 = vmatprep.subr.bf16.mxu0 0
  %381 = vmatpush1.bf16.msra.mxu0 0
  %382 = vmatprep.subr.bf16.mxu0 0
  %383 = vmatpush1.bf16.msra.mxu0 0
  %384 = vmatprep.subr.bf16.mxu0 0
  %385 = vmatpush1.bf16.msra.mxu0 0
  %386 = vmatprep.subr.bf16.mxu0 0
  %387 = vmatpush1.bf16.msra.mxu0 0
  %388 = vmatprep.subr.bf16.mxu0 0
  %389 = vmatpush1.bf16.msra.mxu0 0
  %390 = vmatprep.subr.bf16.mxu0 0
  %391 = vmatpush1.bf16.msra.mxu0 %v366
  %392 = vmatprep.subr.bf16.mxu0 0
  %393 = vmatpush1.bf16.msra.mxu0 %v365
  %394 = vmatprep.subr.bf16.mxu0 0
  %395 = vmatpush2.bf16.msra.mxu0 0
  %396 = vmatprep.subr.bf16.mxu0 0
  %397 = vmatpush2.bf16.msra.mxu0 0
  %398 = vmatprep.subr.bf16.mxu0 0
  %399 = vmatpush2.bf16.msra.mxu0 0
  %400 = vmatprep.subr.bf16.mxu0 0
  %401 = vmatpush2.bf16.msra.mxu0 0
  %402 = vmatprep.subr.bf16.mxu0 0
  %403 = vmatpush2.bf16.msra.mxu0 0
  %404 = vmatprep.subr.bf16.mxu0 0
  %405 = vmatpush2.bf16.msra.mxu0 0
  %406 = vmatprep.subr.bf16.mxu0 0
  %407 = vmatpush2.bf16.msra.mxu0 0
  %408 = vmatprep.subr.bf16.mxu0 0
  %409 = vmatpush2.bf16.msra.mxu0 0
  %410 = vmatprep.mubr.bf16.mxu0 0
  %411 = vmatmul.mubr.bf16.gmra.mxu0 %v376
  %v412 = vpop.f32.mrf.mxu0
  %v413 = vadd.f32 0.0, %v412
  %v414 = vpop.f32.mrf.mxu0
  %v415 = vpop.f32.mrf.mxu0
  %v416 = vadd.f32 0.0, %v415
  %v417 = vpop.f32.mrf.mxu0
  %418 = vdwg.mxu0
  %v419 = vadd.f32 %v223, %v413
  %v420 = vadd.f32 %v224, %v416
  %vm421 = vcmp.gt.f32.partialorder %v419, 0.0
  %vm422 = vcmp.gt.f32.partialorder %v420, 0.0
  %v423 = vmul.f32 %v419, 0.2
  %v424 = vmul.f32 %v420, 0.2
  %v425 = vsel %vm421, %v419, %v423
  %v426 = vsel %vm422, %v420, %v424
  %v427 = vpack.c.bf16 %v426, %v425
  %v429 = vunpack.c.l.b16 %v427
  %v430 = vunpack.c.h.b16 %v427
  %v431 = vpack.c.b16 %v429, %v429
  %v432 = vpack.c.b16 %v430, %v430
  %433 = vrot.lane.b32.xlu0 %v431, 32
  %v434 = vpop.permute.xlu0 %433
  %435 = vrot.lane.b32.xlu0 %v432, 32
  %v436 = vpop.permute.xlu0 %435
  %439 = vst.msk [vmem:[#allocation2] sm:$0xf] %vm45, %v434
  %440 = vst.msk [vmem:[#allocation2 + $0x4] sm:$0xf] %vm45, %v436
  %441 = vrot.lane.b32.xlu0 %v431, 96
  %v442 = vpop.permute.xlu0 %441
  %443 = vrot.lane.b32.xlu0 %v432, 96
  %v444 = vpop.permute.xlu0 %443
  %447 = vst.msk [vmem:[#allocation2 + $0x8] sm:$0xf] %vm45, %v442
  %448 = vst.msk [vmem:[#allocation2 + $0xc] sm:$0xf] %vm45, %v444
  %v449 = vld [vmem:[#allocation2] sm:$0xf]
  %v450 = vld [vmem:[#allocation2 + $0x4] sm:$0xf]
  %v451 = vld [vmem:[#allocation2 + $0x8] sm:$0xf]
  %v452 = vld [vmem:[#allocation2 + $0xc] sm:$0xf]
  %v455 = vunpack.c.l.b16 %v449
  %v456 = vunpack.c.l.b16 %v450
  %v457 = vpack.c.b16 %v456, %v455
  %458 = vrot.lane.b32.xlu0 %v457, 105
  %v459 = vpop.permute.xlu0 %458
  %v462 = vunpack.c.l.b16 %v451
  %v463 = vunpack.c.l.b16 %v452
  %v464 = vpack.c.b16 %v463, %v462
  %465 = vrot.lane.b32.xlu0 %v464, 41
  %v466 = vpop.permute.xlu0 %465
  %v469 = vsel %vm74, %v459, %v466
  %471 = vrot.lane.b32.xlu0 %v457, 87
  %v472 = vpop.permute.xlu0 %471
  %473 = vrot.lane.b32.xlu0 %v464, 23
  %v474 = vpop.permute.xlu0 %473
  %v477 = vsel %vm74, %v472, %v474
  %s479 = scalar_lea.vmem %s1, 32
  %v480 = vld [vmem:[%s479] sm:$0xf]
  %v481 = vld [vmem:[%s479 + $0x4] sm:$0xf]
  %v482 = vld [vmem:[%s479 + $0x8] sm:$0xf]
  %v483 = vld [vmem:[%s479 + $0xc] sm:$0xf]
  %v488 = vunpack.c.l.b16 %v480
  %v489 = vunpack.c.l.b16 %v481
  %v490 = vunpack.c.l.b16 %v482
  %v491 = vunpack.c.l.b16 %v483
  %v492 = vpack.c.b16 %v489, %v488
  %v493 = vpack.c.b16 %v491, %v490
  %v495 = vsel %vm101, %v492, 0
  %v498 = vsel %vm101, %v493, 0
  %500 = vmatprep.subr.bf16.mxu0 0
  %501 = vmatpush1.bf16.msra.mxu0 0
  %502 = vmatprep.subr.bf16.mxu0 0
  %503 = vmatpush1.bf16.msra.mxu0 0
  %504 = vmatprep.subr.bf16.mxu0 0
  %505 = vmatpush1.bf16.msra.mxu0 0
  %506 = vmatprep.subr.bf16.mxu0 0
  %507 = vmatpush1.bf16.msra.mxu0 0
  %508 = vmatprep.subr.bf16.mxu0 0
  %509 = vmatpush1.bf16.msra.mxu0 0
  %510 = vmatprep.subr.bf16.mxu0 0
  %511 = vmatpush1.bf16.msra.mxu0 %v477
  %512 = vmatprep.subr.bf16.mxu0 0
  %513 = vmatpush1.bf16.msra.mxu0 %v427
  %514 = vmatprep.subr.bf16.mxu0 0
  %515 = vmatpush1.bf16.msra.mxu0 %v469
  %516 = vmatprep.subr.bf16.mxu0 0
  %517 = vmatpush2.bf16.msra.mxu0 0
  %518 = vmatprep.subr.bf16.mxu0 0
  %519 = vmatpush2.bf16.msra.mxu0 0
  %520 = vmatprep.subr.bf16.mxu0 0
  %521 = vmatpush2.bf16.msra.mxu0 0
  %522 = vmatprep.subr.bf16.mxu0 0
  %523 = vmatpush2.bf16.msra.mxu0 0
  %524 = vmatprep.subr.bf16.mxu0 0
  %525 = vmatpush2.bf16.msra.mxu0 0
  %526 = vmatprep.subr.bf16.mxu0 0
  %527 = vmatpush2.bf16.msra.mxu0 0
  %528 = vmatprep.subr.bf16.mxu0 0
  %529 = vmatpush2.bf16.msra.mxu0 0
  %530 = vmatprep.subr.bf16.mxu0 0
  %531 = vmatpush2.bf16.msra.mxu0 0
  %532 = vmatprep.mubr.bf16.mxu0 0
  %533 = vmatmul.mubr.bf16.gmra.mxu0 %v495
  %v534 = vpop.f32.mrf.mxu0
  %v535 = vadd.f32 0.0, %v534
  %v536 = vpop.f32.mrf.mxu0
  %v537 = vpop.f32.mrf.mxu0
  %v538 = vadd.f32 0.0, %v537
  %v539 = vpop.f32.mrf.mxu0
  %540 = vmatprep.mubr.bf16.mxu0 0
  %541 = vmatmul.mubr.bf16.gmra.mxu0 %v498
  %v542 = vpop.f32.mrf.mxu0
  %v543 = vadd.f32 0.0, %v542
  %v544 = vpop.f32.mrf.mxu0
  %v545 = vpop.f32.mrf.mxu0
  %v546 = vadd.f32 0.0, %v545
  %v547 = vpop.f32.mrf.mxu0
  %548 = vdwg.mxu0
  %vm549 = vcmp.gt.f32.partialorder %v535, 0.0
  %vm550 = vcmp.gt.f32.partialorder %v538, 0.0
  %vm551 = vcmp.gt.f32.partialorder %v543, 0.0
  %vm552 = vcmp.gt.f32.partialorder %v546, 0.0
  %v553 = vmul.f32 %v535, 0.2
  %v554 = vmul.f32 %v538, 0.2
  %v555 = vmul.f32 %v543, 0.2
  %v556 = vmul.f32 %v546, 0.2
  %v557 = vsel %vm549, %v535, %v553
  %v558 = vsel %vm550, %v538, %v554
  %v559 = vsel %vm551, %v543, %v555
  %v560 = vsel %vm552, %v546, %v556
  %v561 = vpack.c.bf16 %v558, %v557
  %v562 = vpack.c.bf16 %v560, %v559
  %s563 = scalar_lea.vmem %s2, 16
  %v564 = vld [vmem:[%s563] sm:$0xf]
  %v565 = vld [vmem:[%s563 + $0x4] sm:$0xf]
  %v568 = vunpack.c.l.b16 %v564
  %v569 = vunpack.c.l.b16 %v565
  %v570 = vpack.c.b16 %v569, %v568
  %v572 = vsel %vm178, %v570, 0
  %574 = vmatprep.subr.bf16.mxu0 0
  %575 = vmatpush1.bf16.msra.mxu0 0
  %576 = vmatprep.subr.bf16.mxu0 0
  %577 = vmatpush1.bf16.msra.mxu0 0
  %578 = vmatprep.subr.bf16.mxu0 0
  %579 = vmatpush1.bf16.msra.mxu0 0
  %580 = vmatprep.subr.bf16.mxu0 0
  %581 = vmatpush1.bf16.msra.mxu0 0
  %582 = vmatprep.subr.bf16.mxu0 0
  %583 = vmatpush1.bf16.msra.mxu0 0
  %584 = vmatprep.subr.bf16.mxu0 0
  %585 = vmatpush1.bf16.msra.mxu0 0
  %586 = vmatprep.subr.bf16.mxu0 0
  %587 = vmatpush1.bf16.msra.mxu0 %v562
  %588 = vmatprep.subr.bf16.mxu0 0
  %589 = vmatpush1.bf16.msra.mxu0 %v561
  %590 = vmatprep.subr.bf16.mxu0 0
  %591 = vmatpush2.bf16.msra.mxu0 0
  %592 = vmatprep.subr.bf16.mxu0 0
  %593 = vmatpush2.bf16.msra.mxu0 0
  %594 = vmatprep.subr.bf16.mxu0 0
  %595 = vmatpush2.bf16.msra.mxu0 0
  %596 = vmatprep.subr.bf16.mxu0 0
  %597 = vmatpush2.bf16.msra.mxu0 0
  %598 = vmatprep.subr.bf16.mxu0 0
  %599 = vmatpush2.bf16.msra.mxu0 0
  %600 = vmatprep.subr.bf16.mxu0 0
  %601 = vmatpush2.bf16.msra.mxu0 0
  %602 = vmatprep.subr.bf16.mxu0 0
  %603 = vmatpush2.bf16.msra.mxu0 0
  %604 = vmatprep.subr.bf16.mxu0 0
  %605 = vmatpush2.bf16.msra.mxu0 0
  %606 = vmatprep.mubr.bf16.mxu0 0
  %607 = vmatmul.mubr.bf16.gmra.mxu0 %v572
  %v608 = vpop.f32.mrf.mxu0
  %v609 = vadd.f32 0.0, %v608
  %v610 = vpop.f32.mrf.mxu0
  %v611 = vpop.f32.mrf.mxu0
  %v612 = vadd.f32 0.0, %v611
  %v613 = vpop.f32.mrf.mxu0
  %614 = vdwg.mxu0
  %v615 = vadd.f32 %v419, %v609
  %v616 = vadd.f32 %v420, %v612
  %617 = vst [vmem:[%s3] sm:$0xff] %v615
  %618 = vst [vmem:[%s3 + $0x8] sm:$0xff] %v616
  // Predicated region
  $region14: #{residual_stack.1} parent=0 // pred_check
    _
  $region15: #{residual_stack.1} parent=0 // pred_check_branch
    %620 = sbr.rel (0) target = $region17
  $region16: #{residual_stack.1} parent=0 // pred_region
    _
  $region17: #{residual_stack.1} parent=0 // pred_fallthru
    _
  // Predicated region
  $region18: #{residual_stack.1} parent=0 // pred_check
    _
  $region19: #{residual_stack.1} parent=0 // pred_check_branch
    %622 = sbr.rel (0) target = $region21
  $region20: #{residual_stack.1} parent=0 // pred_region
    _
  $region21: #{residual_stack.1} parent=0 // pred_fallthru
    _

</llo_original>
